<compile_context>
chip_gen: v5e
topology: v5e:2x2
jax: 0.10.0
libtpu: 0.0.40
codegen_flags: <defaults>
</compile_context>

<pallas_src>
import jax
import jax.numpy as jnp
from jax import lax
from jax.experimental import pallas as pl
from jax.experimental.pallas import tpu as pltpu

# Sparse4D box encoding indices
X, Y, Z = 0, 1, 2
SIN_YAW, COS_YAW = 6, 7
CNS, YNS = 0, 1

BOX_LOSS_WEIGHT = 0.25   # L1Loss(loss_weight=0.25)
FOCAL_ALPHA = 2.0        # GaussianFocalLoss alpha
FOCAL_GAMMA = 4.0        # GaussianFocalLoss gamma (targets are binary -> exact)
COS_EPS = 1e-8           # torch.nn.functional.cosine_similarity eps
GF_EPS = 1e-12           # GaussianFocalLoss eps

NC = 2                   # leading "parallel" grid axis (both TCs on v7x)
TM_MAX = 1024            # lanes per tile


def _round_up(x, m):
    return ((x + m - 1) // m) * m


def _sparse_box3d_loss_kernel(box_ref, tgt_ref, w_ref, qual_ref, aux_ref,
                              out_ref, acc_box, acc_cns, acc_yns):
    i = pl.program_id(1)

    @pl.when(i == 0)
    def _init():
        acc_box[...] = jnp.zeros_like(acc_box)
        acc_cns[...] = jnp.zeros_like(acc_cns)
        acc_yns[...] = jnp.zeros_like(acc_yns)

    box = box_ref[...].astype(jnp.float32)     # (D, TM)
    tgt = tgt_ref[...].astype(jnp.float32)     # (D, TM)
    w = w_ref[...].astype(jnp.float32)         # (D, TM)
    qual = qual_ref[...].astype(jnp.float32)   # (2, TM)
    aux = aux_ref[...]                         # (2, TM) f32: row0 allow, row1 valid
    allow = aux[0:1, :]
    valid = aux[1:2, :]

    b_sin = box[SIN_YAW:SIN_YAW + 1, :]
    b_cos = box[COS_YAW:COS_YAW + 1, :]
    t_sin = tgt[SIN_YAW:SIN_YAW + 1, :]
    t_cos = tgt[COS_YAW:COS_YAW + 1, :]

    # cosine similarity between predicted and target yaw (sin, cos) vectors.
    # Only its SIGN is used downstream, so the positive approximate reciprocal
    # (EUP slot, otherwise idle) is semantically exact.
    dot = t_sin * b_sin + t_cos * b_cos
    nb = jnp.maximum(jnp.sqrt(b_sin * b_sin + b_cos * b_cos), COS_EPS)
    nt = jnp.maximum(jnp.sqrt(t_sin * t_sin + t_cos * t_cos), COS_EPS)
    cos_sim = dot * pl.reciprocal(nb * nt, approx=True)        # (1, TM)

    if_reverse = (cos_sim < 0.0) & (allow > 0.5)
    flip = jnp.where(if_reverse, -1.0, 1.0)                    # (1, TM)

    # ---- box loss: weighted L1; correct only the two yaw rows --------------
    l1 = jnp.abs(box - tgt) * w                                # (D, TM)
    w_sin = w[SIN_YAW:SIN_YAW + 1, :]
    w_cos = w[COS_YAW:COS_YAW + 1, :]
    yaw_l1 = (jnp.abs(b_sin - t_sin * flip) * w_sin
              + jnp.abs(b_cos - t_cos * flip) * w_cos)
    other_l1 = (jnp.sum(l1, axis=0, keepdims=True)
                - l1[SIN_YAW:SIN_YAW + 1, :]
                - l1[COS_YAW:COS_YAW + 1, :])
    acc_box[...] += other_l1 + yaw_l1                          # padded lanes: w == 0

    # ---- centerness loss: BCE-with-logits vs exp(-||dxyz||) ----------------
    cns = qual[CNS:CNS + 1, :]                                 # raw logits
    dx = tgt[X:X + 1, :] - box[X:X + 1, :]
    dy = tgt[Y:Y + 1, :] - box[Y:Y + 1, :]
    dz = tgt[Z:Z + 1, :] - box[Z:Z + 1, :]
    cns_target = jnp.exp(-jnp.sqrt(dx * dx + dy * dy + dz * dz))
    bce = (jnp.maximum(cns, 0.0) - cns * cns_target
           + jnp.log1p(jnp.exp(-jnp.abs(cns))))
    acc_cns[...] += bce * valid                                # mask padded lanes

    # ---- yawness loss: Gaussian focal loss on sigmoid(yns), binary target --
    yns = jax.nn.sigmoid(qual[YNS:YNS + 1, :])
    yns_target = ((cos_sim * flip) > 0.0).astype(jnp.float32)
    one_m_yns = 1.0 - yns
    pos_w = yns_target
    one_m_t = 1.0 - yns_target
    neg_w = one_m_t * one_m_t
    neg_w = neg_w * neg_w                                      # gamma = 4
    focal = (-jnp.log(yns + GF_EPS) * one_m_yns * one_m_yns * pos_w   # alpha = 2
             - jnp.log(one_m_yns + GF_EPS) * yns * yns * neg_w)
    acc_yns[...] += focal * valid                              # mask padded lanes

    @pl.when(i == pl.num_programs(1) - 1)
    def _finalize():
        box_sum = jnp.sum(acc_box[...])
        cns_sum = jnp.sum(acc_cns[...])
        yns_sum = jnp.sum(acc_yns[...])
        row = lax.broadcasted_iota(jnp.int32, out_ref.shape, 0)
        out = jnp.where(row == 0, box_sum, 0.0)
        out = jnp.where(row == 1, cns_sum, out)
        out = jnp.where(row == 2, yns_sum, out)
        out_ref[...] = out


def sparse_box3d_loss(box, box_target, weight=None, quality=None,
                      cls_target=None, cls_allow_reverse=None,
                      avg_factor=None, suffix=""):
    """box, box_target, weight: (B, N, D); quality: (B, N, 2); cls_target: (B, N)."""
    B, N, D = box.shape
    M = B * N
    if weight is None:
        weight = jnp.ones_like(box)
    if avg_factor is None:
        avg_factor = 1.0
    has_quality = quality is not None
    if not has_quality:
        quality = jnp.zeros((B, N, 2), dtype=box.dtype)
    Q = quality.shape[-1]

    # Lane-dense layout: (D, M_pad), M on the lane axis, padded to the tiling.
    tm = min(TM_MAX, _round_up(max((M + NC - 1) // NC, 1), 128))
    m_pad = _round_up(M, NC * tm)
    tiles_per_core = m_pad // (NC * tm)

    def to_lane_dense(x, d):
        x2 = jnp.transpose(x.reshape(M, d))                    # (d, M), native dtype
        return jnp.pad(x2, ((0, 0), (0, m_pad - M)))

    box2 = to_lane_dense(box, D)
    tgt2 = to_lane_dense(box_target, D)
    w2 = to_lane_dense(weight, D)
    qual2 = to_lane_dense(quality, Q)

    # aux row 0: "class allows yaw reverse" mask; row 1: row-valid mask.
    if cls_allow_reverse is not None and cls_target is not None:
        cls_flat = cls_target.reshape(M)
        allow_vals = jnp.asarray(cls_allow_reverse, dtype=cls_flat.dtype)
        allow = (cls_flat[None, :] == allow_vals[:, None]).any(axis=0)
        allow = allow.astype(jnp.float32)
    else:
        allow = jnp.zeros((M,), jnp.float32)
    valid = jnp.ones((M,), jnp.float32)
    aux = jnp.stack([allow, valid], axis=0)                    # (2, M)
    aux = jnp.pad(aux, ((0, 0), (0, m_pad - M)))               # padding: allow=0, valid=0

    def lane_map(c, i):
        return (0, c * tiles_per_core + i)

    grid_spec = pltpu.PrefetchScalarGridSpec(
        num_scalar_prefetch=0,
        grid=(NC, tiles_per_core),
        in_specs=[
            pl.BlockSpec((D, tm), lane_map),
            pl.BlockSpec((D, tm), lane_map),
            pl.BlockSpec((D, tm), lane_map),
            pl.BlockSpec((Q, tm), lane_map),
            pl.BlockSpec((2, tm), lane_map),
        ],
        out_specs=pl.BlockSpec((8, 128), lambda c, i: (c, 0)),
        scratch_shapes=[
            pltpu.VMEM((1, tm), jnp.float32),
            pltpu.VMEM((1, tm), jnp.float32),
            pltpu.VMEM((1, tm), jnp.float32),
        ],
    )

    raw = pl.pallas_call(
        _sparse_box3d_loss_kernel,
        out_shape=jax.ShapeDtypeStruct((NC * 8, 128), jnp.float32),
        grid_spec=grid_spec,
        compiler_params=pltpu.CompilerParams(
            dimension_semantics=("parallel", "arbitrary")),
    )(box2, tgt2, w2, qual2, aux)

    # combine the per-core partial sums; apply avg_factor / loss weights here
    # (works with traced avg_factor; scalar plumbing, not compute).
    sums = raw.reshape(NC, 8, 128)[:, :3, 0].sum(axis=0)       # (3,)
    inv_avg = 1.0 / jnp.asarray(avg_factor, jnp.float32)

    output = {f"loss_box{suffix}": sums[0] * inv_avg * BOX_LOSS_WEIGHT}
    if has_quality:
        output[f"loss_cns{suffix}"] = sums[1] * inv_avg
        output[f"loss_yns{suffix}"] = sums[2] * inv_avg
    return output


def _reference(box, box_target, weight, quality, cls_target,
               cls_allow_reverse, avg_factor):
    """Pure-JAX reference mirroring the PyTorch semantics."""
    box = box.astype(jnp.float32)
    tgt = box_target.astype(jnp.float32)
    weight = weight.astype(jnp.float32)
    quality = quality.astype(jnp.float32)

    yaw_b = box[..., [SIN_YAW, COS_YAW]]
    yaw_t = tgt[..., [SIN_YAW, COS_YAW]]
    dot = jnp.sum(yaw_b * yaw_t, axis=-1)
    nb = jnp.maximum(jnp.linalg.norm(yaw_b, axis=-1), COS_EPS)
    nt = jnp.maximum(jnp.linalg.norm(yaw_t, axis=-1), COS_EPS)
    cos_sim = dot / (nb * nt)
    allow = jnp.asarray(cls_allow_reverse, dtype=cls_target.dtype)
    in_allow = (cls_target[..., None] == allow).any(-1)
    if_reverse = (cos_sim < 0) & in_allow
    flip = jnp.where(if_reverse, -1.0, 1.0)[..., None]
    tgt = tgt.at[..., [SIN_YAW, COS_YAW]].set(tgt[..., [SIN_YAW, COS_YAW]] * flip)
    cos_sim = cos_sim * flip[..., 0]

    box_loss = jnp.sum(jnp.abs(box - tgt) * weight) / avg_factor * BOX_LOSS_WEIGHT

    cns = quality[..., CNS]
    yns = jax.nn.sigmoid(quality[..., YNS])
    cns_target = jnp.exp(-jnp.linalg.norm(tgt[..., :3] - box[..., :3], axis=-1))
    bce = jnp.maximum(cns, 0.0) - cns * cns_target + jnp.log1p(jnp.exp(-jnp.abs(cns)))
    cns_loss = jnp.sum(bce) / avg_factor

    yns_target = (cos_sim > 0).astype(jnp.float32)
    pos_w = (yns_target == 1.0).astype(jnp.float32)
    neg_w = (1.0 - yns_target) ** 4
    pos_loss = -jnp.log(yns + GF_EPS) * (1.0 - yns) ** 2 * pos_w
    neg_loss = -jnp.log(1.0 - yns + GF_EPS) * yns ** 2 * neg_w
    yns_loss = jnp.sum(pos_loss + neg_loss) / avg_factor
    return box_loss, cns_loss, yns_loss


if __name__ == "__main__":
    key = jax.random.PRNGKey(0)
    kb, kt, kw, kq, kc = jax.random.split(key, 5)

    B, N, D = 2, 8, 11                    # (batch, num_anchors, box dims)
    box = jax.random.normal(kb, (B, N, D), dtype=jnp.float32)
    box_target = jax.random.normal(kt, (B, N, D), dtype=jnp.float32)
    weight = jax.random.uniform(kw, (B, N, D), dtype=jnp.float32)
    quality = jax.random.normal(kq, (B, N, 2), dtype=jnp.float32)
    cls_target = jax.random.randint(kc, (B, N), 0, 10, dtype=jnp.int32)
    cls_allow_reverse = [0, 2, 5]
    avg_factor = 10.0

    out = sparse_box3d_loss(box, box_target, weight=weight, quality=quality,
                            cls_target=cls_target,
                            cls_allow_reverse=cls_allow_reverse,
                            avg_factor=avg_factor)
    jax.block_until_ready(out)

    ref_box, ref_cns, ref_yns = _reference(box, box_target, weight, quality,
                                           cls_target, cls_allow_reverse, avg_factor)
    assert jnp.allclose(out["loss_box"], ref_box, rtol=1e-5, atol=1e-5)
    assert jnp.allclose(out["loss_cns"], ref_cns, rtol=1e-5, atol=1e-5)
    assert jnp.allclose(out["loss_yns"], ref_yns, rtol=1e-5, atol=1e-5)

    print("KERNEL_OK")
</pallas_src>

<mosaic_0001>
module attributes {stable_mosaic.version = 11 : i64} {
  func.func @_sparse_box3d_loss_kernel(%arg0: i32, %arg1: i32, %arg2: memref<11x128xf32, #tpu.memory_space<vmem>>, %arg3: memref<11x128xf32, #tpu.memory_space<vmem>>, %arg4: memref<11x128xf32, #tpu.memory_space<vmem>>, %arg5: memref<2x128xf32, #tpu.memory_space<vmem>>, %arg6: memref<2x128xf32, #tpu.memory_space<vmem>>, %arg7: memref<8x128xf32, #tpu.memory_space<vmem>>, %arg8: memref<1x128xf32, #tpu.memory_space<vmem>>, %arg9: memref<1x128xf32, #tpu.memory_space<vmem>>, %arg10: memref<1x128xf32, #tpu.memory_space<vmem>>) attributes {dimension_semantics = [#tpu.dimension_semantics<parallel>, #tpu.dimension_semantics<arbitrary>], iteration_bounds = array<i64: 2, 1>, scalar_prefetch = 0 : i64, scratch_operands = 3 : i64, tpu.core_type = #tpu.core_type<tc>, window_params = [{transform_indices = @transform_0, window_bounds = array<i64: 11, 128>}, {transform_indices = @transform_1, window_bounds = array<i64: 11, 128>}, {transform_indices = @transform_2, window_bounds = array<i64: 11, 128>}, {transform_indices = @transform_3, window_bounds = array<i64: 2, 128>}, {transform_indices = @transform_4, window_bounds = array<i64: 2, 128>}, {transform_indices = @transform_5, window_bounds = array<i64: 8, 128>}]} {
    %c0_i32 = arith.constant 0 : i32
    %0 = arith.cmpi eq, %arg1, %c0_i32 : i32
    %1 = arith.extui %0 : i1 to i32
    %c0_i32_0 = arith.constant 0 : i32
    %2 = arith.cmpi ne, %1, %c0_i32_0 : i32
    scf.if %2 {
      %cst_40 = arith.constant 0.000000e+00 : f32
      %136 = vector.broadcast %cst_40 : f32 to vector<1x128xf32>
      %c0_41 = arith.constant 0 : index
      %c0_42 = arith.constant 0 : index
      %137 = vector.load %arg8[%c0_41, %c0_42] : memref<1x128xf32, #tpu.memory_space<vmem>>, vector<1x128xf32>
      tpu.vector_store %arg8[%c0_41, %c0_42], %136 {strides = array<i32>} : memref<1x128xf32, #tpu.memory_space<vmem>>, vector<1x128xf32>,
      %cst_43 = arith.constant 0.000000e+00 : f32
      %138 = vector.broadcast %cst_43 : f32 to vector<1x128xf32>
      %c0_44 = arith.constant 0 : index
      %c0_45 = arith.constant 0 : index
      %139 = vector.load %arg9[%c0_44, %c0_45] : memref<1x128xf32, #tpu.memory_space<vmem>>, vector<1x128xf32>
      tpu.vector_store %arg9[%c0_44, %c0_45], %138 {strides = array<i32>} : memref<1x128xf32, #tpu.memory_space<vmem>>, vector<1x128xf32>,
      %cst_46 = arith.constant 0.000000e+00 : f32
      %140 = vector.broadcast %cst_46 : f32 to vector<1x128xf32>
      %c0_47 = arith.constant 0 : index
      %c0_48 = arith.constant 0 : index
      %141 = vector.load %arg10[%c0_47, %c0_48] : memref<1x128xf32, #tpu.memory_space<vmem>>, vector<1x128xf32>
      tpu.vector_store %arg10[%c0_47, %c0_48], %140 {strides = array<i32>} : memref<1x128xf32, #tpu.memory_space<vmem>>, vector<1x128xf32>,
    } else {
    }
    %c0 = arith.constant 0 : index
    %c0_1 = arith.constant 0 : index
    %3 = vector.load %arg2[%c0, %c0_1] : memref<11x128xf32, #tpu.memory_space<vmem>>, vector<11x128xf32>
    %c0_2 = arith.constant 0 : index
    %c0_3 = arith.constant 0 : index
    %4 = vector.load %arg3[%c0_2, %c0_3] : memref<11x128xf32, #tpu.memory_space<vmem>>, vector<11x128xf32>
    %c0_4 = arith.constant 0 : index
    %c0_5 = arith.constant 0 : index
    %5 = vector.load %arg4[%c0_4, %c0_5] : memref<11x128xf32, #tpu.memory_space<vmem>>, vector<11x128xf32>
    %c0_6 = arith.constant 0 : index
    %c0_7 = arith.constant 0 : index
    %6 = vector.load %arg5[%c0_6, %c0_7] : memref<2x128xf32, #tpu.memory_space<vmem>>, vector<2x128xf32>
    %c0_8 = arith.constant 0 : index
    %c0_9 = arith.constant 0 : index
    %7 = vector.load %arg6[%c0_8, %c0_9] : memref<2x128xf32, #tpu.memory_space<vmem>>, vector<2x128xf32>
    %8 = vector.extract_strided_slice %7 {offsets = [0, 0], sizes = [1, 128], strides = [1, 1]} : vector<2x128xf32> to vector<1x128xf32>
    %9 = vector.extract_strided_slice %7 {offsets = [1, 0], sizes = [1, 128], strides = [1, 1]} : vector<2x128xf32> to vector<1x128xf32>
    %10 = vector.extract_strided_slice %3 {offsets = [6, 0], sizes = [1, 128], strides = [1, 1]} : vector<11x128xf32> to vector<1x128xf32>
    %11 = vector.extract_strided_slice %3 {offsets = [7, 0], sizes = [1, 128], strides = [1, 1]} : vector<11x128xf32> to vector<1x128xf32>
    %12 = vector.extract_strided_slice %4 {offsets = [6, 0], sizes = [1, 128], strides = [1, 1]} : vector<11x128xf32> to vector<1x128xf32>
    %13 = vector.extract_strided_slice %4 {offsets = [7, 0], sizes = [1, 128], strides = [1, 1]} : vector<11x128xf32> to vector<1x128xf32>
    %14 = arith.mulf %12, %10 : vector<1x128xf32>
    %15 = arith.mulf %13, %11 : vector<1x128xf32>
    %16 = arith.addf %14, %15 : vector<1x128xf32>
    %17 = arith.mulf %10, %10 : vector<1x128xf32>
    %18 = arith.mulf %11, %11 : vector<1x128xf32>
    %19 = arith.addf %17, %18 : vector<1x128xf32>
    %20 = math.sqrt %19 : vector<1x128xf32>
    %cst = arith.constant 9.99999993E-9 : f32
    %21 = vector.broadcast %cst : f32 to vector<1x128xf32>
    %22 = arith.maximumf %20, %21 : vector<1x128xf32>
    %23 = arith.mulf %12, %12 : vector<1x128xf32>
    %24 = arith.mulf %13, %13 : vector<1x128xf32>
    %25 = arith.addf %23, %24 : vector<1x128xf32>
    %26 = math.sqrt %25 : vector<1x128xf32>
    %cst_10 = arith.constant 9.99999993E-9 : f32
    %27 = vector.broadcast %cst_10 : f32 to vector<1x128xf32>
    %28 = arith.maximumf %26, %27 : vector<1x128xf32>
    %29 = arith.mulf %22, %28 : vector<1x128xf32>
    %30 = tpu.reciprocal %29 {approx = true} : vector<1x128xf32> -> vector<1x128xf32>
    %31 = arith.mulf %16, %30 : vector<1x128xf32>
    %cst_11 = arith.constant 0.000000e+00 : f32
    %32 = vector.broadcast %cst_11 : f32 to vector<1x128xf32>
    %33 = arith.cmpf olt, %31, %32 : vector<1x128xf32>
    %cst_12 = arith.constant 5.000000e-01 : f32
    %34 = vector.broadcast %cst_12 : f32 to vector<1x128xf32>
    %35 = arith.cmpf ogt, %8, %34 : vector<1x128xf32>
    %36 = arith.andi %33, %35 : vector<1x128xi1>
    %cst_13 = arith.constant -1.000000e+00 : f32
    %cst_14 = arith.constant 1.000000e+00 : f32
    %37 = vector.broadcast %cst_13 : f32 to vector<1x128xf32>
    %38 = vector.broadcast %cst_14 : f32 to vector<1x128xf32>
    %39 = arith.select %36, %37, %38 : vector<1x128xi1>, vector<1x128xf32>
    %40 = arith.subf %3, %4 : vector<11x128xf32>
    %41 = math.absf %40 : vector<11x128xf32>
    %42 = arith.mulf %41, %5 : vector<11x128xf32>
    %43 = vector.extract_strided_slice %5 {offsets = [6, 0], sizes = [1, 128], strides = [1, 1]} : vector<11x128xf32> to vector<1x128xf32>
    %44 = vector.extract_strided_slice %5 {offsets = [7, 0], sizes = [1, 128], strides = [1, 1]} : vector<11x128xf32> to vector<1x128xf32>
    %45 = arith.mulf %12, %39 : vector<1x128xf32>
    %46 = arith.subf %10, %45 : vector<1x128xf32>
    %47 = math.absf %46 : vector<1x128xf32>
    %48 = arith.mulf %47, %43 : vector<1x128xf32>
    %49 = arith.mulf %13, %39 : vector<1x128xf32>
    %50 = arith.subf %11, %49 : vector<1x128xf32>
    %51 = math.absf %50 : vector<1x128xf32>
    %52 = arith.mulf %51, %44 : vector<1x128xf32>
    %53 = arith.addf %48, %52 : vector<1x128xf32>
    %cst_15 = arith.constant dense<0.000000e+00> : vector<128xf32>
    %54 = vector.multi_reduction <add>, %42, %cst_15 [0] : vector<11x128xf32> to vector<128xf32>
    %55 = vector.shape_cast %54 : vector<128xf32> to vector<1x128xf32>
    %56 = vector.extract_strided_slice %42 {offsets = [6, 0], sizes = [1, 128], strides = [1, 1]} : vector<11x128xf32> to vector<1x128xf32>
    %57 = arith.subf %55, %56 : vector<1x128xf32>
    %58 = vector.extract_strided_slice %42 {offsets = [7, 0], sizes = [1, 128], strides = [1, 1]} : vector<11x128xf32> to vector<1x128xf32>
    %59 = arith.subf %57, %58 : vector<1x128xf32>
    %c0_16 = arith.constant 0 : index
    %c0_17 = arith.constant 0 : index
    %60 = vector.load %arg8[%c0_16, %c0_17] : memref<1x128xf32, #tpu.memory_space<vmem>>, vector<1x128xf32>
    %61 = arith.addf %59, %53 : vector<1x128xf32>
    %62 = arith.addf %60, %61 : vector<1x128xf32>
    %c0_18 = arith.constant 0 : index
    %c0_19 = arith.constant 0 : index
    %63 = vector.load %arg8[%c0_18, %c0_19] : memref<1x128xf32, #tpu.memory_space<vmem>>, vector<1x128xf32>
    tpu.vector_store %arg8[%c0_18, %c0_19], %62 {strides = array<i32>} : memref<1x128xf32, #tpu.memory_space<vmem>>, vector<1x128xf32>,
    %64 = vector.extract_strided_slice %6 {offsets = [0, 0], sizes = [1, 128], strides = [1, 1]} : vector<2x128xf32> to vector<1x128xf32>
    %65 = vector.extract_strided_slice %4 {offsets = [0, 0], sizes = [1, 128], strides = [1, 1]} : vector<11x128xf32> to vector<1x128xf32>
    %66 = vector.extract_strided_slice %3 {offsets = [0, 0], sizes = [1, 128], strides = [1, 1]} : vector<11x128xf32> to vector<1x128xf32>
    %67 = arith.subf %65, %66 : vector<1x128xf32>
    %68 = vector.extract_strided_slice %4 {offsets = [1, 0], sizes = [1, 128], strides = [1, 1]} : vector<11x128xf32> to vector<1x128xf32>
    %69 = vector.extract_strided_slice %3 {offsets = [1, 0], sizes = [1, 128], strides = [1, 1]} : vector<11x128xf32> to vector<1x128xf32>
    %70 = arith.subf %68, %69 : vector<1x128xf32>
    %71 = vector.extract_strided_slice %4 {offsets = [2, 0], sizes = [1, 128], strides = [1, 1]} : vector<11x128xf32> to vector<1x128xf32>
    %72 = vector.extract_strided_slice %3 {offsets = [2, 0], sizes = [1, 128], strides = [1, 1]} : vector<11x128xf32> to vector<1x128xf32>
    %73 = arith.subf %71, %72 : vector<1x128xf32>
    %74 = arith.mulf %67, %67 : vector<1x128xf32>
    %75 = arith.mulf %70, %70 : vector<1x128xf32>
    %76 = arith.addf %74, %75 : vector<1x128xf32>
    %77 = arith.mulf %73, %73 : vector<1x128xf32>
    %78 = arith.addf %76, %77 : vector<1x128xf32>
    %79 = math.sqrt %78 : vector<1x128xf32>
    %cst_20 = arith.constant 0.000000e+00 : f32
    %80 = vector.broadcast %cst_20 : f32 to vector<1x128xf32>
    %81 = arith.subf %80, %79 : vector<1x128xf32>
    %82 = math.exp %81 : vector<1x128xf32>
    %cst_21 = arith.constant 0.000000e+00 : f32
    %83 = vector.broadcast %cst_21 : f32 to vector<1x128xf32>
    %84 = arith.maximumf %64, %83 : vector<1x128xf32>
    %85 = arith.mulf %64, %82 : vector<1x128xf32>
    %86 = arith.subf %84, %85 : vector<1x128xf32>
    %87 = math.absf %64 : vector<1x128xf32>
    %cst_22 = arith.constant 0.000000e+00 : f32
    %88 = vector.broadcast %cst_22 : f32 to vector<1x128xf32>
    %89 = arith.subf %88, %87 : vector<1x128xf32>
    %90 = math.exp %89 : vector<1x128xf32>
    %91 = math.log1p %90 : vector<1x128xf32>
    %92 = arith.addf %86, %91 : vector<1x128xf32>
    %c0_23 = arith.constant 0 : index
    %c0_24 = arith.constant 0 : index
    %93 = vector.load %arg9[%c0_23, %c0_24] : memref<1x128xf32, #tpu.memory_space<vmem>>, vector<1x128xf32>
    %94 = arith.mulf %92, %9 : vector<1x128xf32>
    %95 = arith.addf %93, %94 : vector<1x128xf32>
    %c0_25 = arith.constant 0 : index
    %c0_26 = arith.constant 0 : index
    %96 = vector.load %arg9[%c0_25, %c0_26] : memref<1x128xf32, #tpu.memory_space<vmem>>, vector<1x128xf32>
    tpu.vector_store %arg9[%c0_25, %c0_26], %95 {strides = array<i32>} : memref<1x128xf32, #tpu.memory_space<vmem>>, vector<1x128xf32>,
    %97 = vector.extract_strided_slice %6 {offsets = [1, 0], sizes = [1, 128], strides = [1, 1]} : vector<2x128xf32> to vector<1x128xf32>
    %98 = arith.negf %97 : vector<1x128xf32>
    %99 = math.exp %98 : vector<1x128xf32>
    %cst_27 = arith.constant 1.000000e+00 : f32
    %100 = vector.broadcast %cst_27 : f32 to vector<1x128xf32>
    %101 = arith.addf %100, %99 : vector<1x128xf32>
    %102 = arith.divf %100, %101 : vector<1x128xf32>
    %103 = arith.mulf %31, %39 : vector<1x128xf32>
    %cst_28 = arith.constant 0.000000e+00 : f32
    %104 = vector.broadcast %cst_28 : f32 to vector<1x128xf32>
    %105 = arith.cmpf ogt, %103, %104 : vector<1x128xf32>
    %106 = arith.extui %105 : vector<1x128xi1> to vector<1x128xi32>
    %107 = arith.sitofp %106 : vector<1x128xi32> to vector<1x128xf32>
    %cst_29 = arith.constant 1.000000e+00 : f32
    %108 = vector.broadcast %cst_29 : f32 to vector<1x128xf32>
    %109 = arith.subf %108, %102 : vector<1x128xf32>
    %cst_30 = arith.constant 1.000000e+00 : f32
    %110 = vector.broadcast %cst_30 : f32 to vector<1x128xf32>
    %111 = arith.subf %110, %107 : vector<1x128xf32>
    %112 = arith.mulf %111, %111 : vector<1x128xf32>
    %113 = arith.mulf %112, %112 : vector<1x128xf32>
    %cst_31 = arith.constant 9.99999996E-13 : f32
    %114 = vector.broadcast %cst_31 : f32 to vector<1x128xf32>
    %115 = arith.addf %102, %114 : vector<1x128xf32>
    %116 = math.log %115 : vector<1x128xf32>
    %cst_32 = arith.constant 0.000000e+00 : f32
    %117 = vector.broadcast %cst_32 : f32 to vector<1x128xf32>
    %118 = arith.subf %117, %116 : vector<1x128xf32>
    %119 = arith.mulf %118, %109 : vector<1x128xf32>
    %120 = arith.mulf %119, %109 : vector<1x128xf32>
    %121 = arith.mulf %120, %107 : vector<1x128xf32>
    %cst_33 = arith.constant 9.99999996E-13 : f32
    %122 = vector.broadcast %cst_33 : f32 to vector<1x128xf32>
    %123 = arith.addf %109, %122 : vector<1x128xf32>
    %124 = math.log %123 : vector<1x128xf32>
    %125 = arith.mulf %124, %102 : vector<1x128xf32>
    %126 = arith.mulf %125, %102 : vector<1x128xf32>
    %127 = arith.mulf %126, %113 : vector<1x128xf32>
    %128 = arith.subf %121, %127 : vector<1x128xf32>
    %c0_34 = arith.constant 0 : index
    %c0_35 = arith.constant 0 : index
    %129 = vector.load %arg10[%c0_34, %c0_35] : memref<1x128xf32, #tpu.memory_space<vmem>>, vector<1x128xf32>
    %130 = arith.mulf %128, %9 : vector<1x128xf32>
    %131 = arith.addf %129, %130 : vector<1x128xf32>
    %c0_36 = arith.constant 0 : index
    %c0_37 = arith.constant 0 : index
    %132 = vector.load %arg10[%c0_36, %c0_37] : memref<1x128xf32, #tpu.memory_space<vmem>>, vector<1x128xf32>
    tpu.vector_store %arg10[%c0_36, %c0_37], %131 {strides = array<i32>} : memref<1x128xf32, #tpu.memory_space<vmem>>, vector<1x128xf32>,
    %c0_i32_38 = arith.constant 0 : i32
    %133 = arith.cmpi eq, %arg1, %c0_i32_38 : i32
    %134 = arith.extui %133 : i1 to i32
    %c0_i32_39 = arith.constant 0 : i32
    %135 = arith.cmpi ne, %134, %c0_i32_39 : i32
    scf.if %135 {
      %c0_40 = arith.constant 0 : index
      %c0_41 = arith.constant 0 : index
      %136 = vector.load %arg8[%c0_40, %c0_41] : memref<1x128xf32, #tpu.memory_space<vmem>>, vector<1x128xf32>
      %137 = vector.shape_cast %136 : vector<1x128xf32> to vector<1x1x128xf32>
      %cst_42 = arith.constant dense<0.000000e+00> : vector<1xf32>
      %138 = vector.multi_reduction <add>, %137, %cst_42 [1, 2] : vector<1x1x128xf32> to vector<1xf32>
      %139 = vector.shape_cast %138 : vector<1xf32> to vector<1x1x1xf32>
      %140 = vector.extract %139[0, 0, 0] : f32 from vector<1x1x1xf32>
      %c0_43 = arith.constant 0 : index
      %c0_44 = arith.constant 0 : index
      %141 = vector.load %arg9[%c0_43, %c0_44] : memref<1x128xf32, #tpu.memory_space<vmem>>, vector<1x128xf32>
      %142 = vector.shape_cast %141 : vector<1x128xf32> to vector<1x1x128xf32>
      %cst_45 = arith.constant dense<0.000000e+00> : vector<1xf32>
      %143 = vector.multi_reduction <add>, %142, %cst_45 [1, 2] : vector<1x1x128xf32> to vector<1xf32>
      %144 = vector.shape_cast %143 : vector<1xf32> to vector<1x1x1xf32>
      %145 = vector.extract %144[0, 0, 0] : f32 from vector<1x1x1xf32>
      %c0_46 = arith.constant 0 : index
      %c0_47 = arith.constant 0 : index
      %146 = vector.load %arg10[%c0_46, %c0_47] : memref<1x128xf32, #tpu.memory_space<vmem>>, vector<1x128xf32>
      %147 = vector.shape_cast %146 : vector<1x128xf32> to vector<1x1x128xf32>
      %cst_48 = arith.constant dense<0.000000e+00> : vector<1xf32>
      %148 = vector.multi_reduction <add>, %147, %cst_48 [1, 2] : vector<1x1x128xf32> to vector<1xf32>
      %149 = vector.shape_cast %148 : vector<1xf32> to vector<1x1x1xf32>
      %150 = vector.extract %149[0, 0, 0] : f32 from vector<1x1x1xf32>
      %151 = tpu.iota {dimensions = array<i32: 0>} : vector<8x128xi32>
      %c0_i32_49 = arith.constant 0 : i32
      %152 = vector.broadcast %c0_i32_49 : i32 to vector<8x128xi32>
      %153 = arith.cmpi eq, %151, %152 : vector<8x128xi32>
      %cst_50 = arith.constant 0.000000e+00 : f32
      %154 = vector.broadcast %140 : f32 to vector<8x128xf32>
      %155 = vector.broadcast %cst_50 : f32 to vector<8x128xf32>
      %156 = arith.select %153, %154, %155 : vector<8x128xi1>, vector<8x128xf32>
      %c1_i32 = arith.constant 1 : i32
      %157 = vector.broadcast %c1_i32 : i32 to vector<8x128xi32>
      %158 = arith.cmpi eq, %151, %157 : vector<8x128xi32>
      %159 = vector.broadcast %145 : f32 to vector<8x128xf32>
      %160 = arith.select %158, %159, %156 : vector<8x128xi1>, vector<8x128xf32>
      %c2_i32 = arith.constant 2 : i32
      %161 = vector.broadcast %c2_i32 : i32 to vector<8x128xi32>
      %162 = arith.cmpi eq, %151, %161 : vector<8x128xi32>
      %163 = vector.broadcast %150 : f32 to vector<8x128xf32>
      %164 = arith.select %162, %163, %160 : vector<8x128xi1>, vector<8x128xf32>
      %c0_51 = arith.constant 0 : index
      %c0_52 = arith.constant 0 : index
      %165 = vector.load %arg7[%c0_51, %c0_52] : memref<8x128xf32, #tpu.memory_space<vmem>>, vector<8x128xf32>
      tpu.vector_store %arg7[%c0_51, %c0_52], %164 {strides = array<i32>} : memref<8x128xf32, #tpu.memory_space<vmem>>, vector<8x128xf32>,
    } else {
    }
    return
  }
  func.func @transform_0(%arg0: i32, %arg1: i32) -> (i32, i32) {
    %c1_i32 = arith.constant 1 : i32
    %0 = arith.muli %arg0, %c1_i32 : i32
    %1 = arith.addi %0, %arg1 : i32
    %c0_i32 = arith.constant 0 : i32
    %c0_i32_0 = arith.constant 0 : i32
    return %c0_i32, %1 : i32, i32
  }
  func.func @transform_1(%arg0: i32, %arg1: i32) -> (i32, i32) {
    %c1_i32 = arith.constant 1 : i32
    %0 = arith.muli %arg0, %c1_i32 : i32
    %1 = arith.addi %0, %arg1 : i32
    %c0_i32 = arith.constant 0 : i32
    %c0_i32_0 = arith.constant 0 : i32
    return %c0_i32, %1 : i32, i32
  }
  func.func @transform_2(%arg0: i32, %arg1: i32) -> (i32, i32) {
    %c1_i32 = arith.constant 1 : i32
    %0 = arith.muli %arg0, %c1_i32 : i32
    %1 = arith.addi %0, %arg1 : i32
    %c0_i32 = arith.constant 0 : i32
    %c0_i32_0 = arith.constant 0 : i32
    return %c0_i32, %1 : i32, i32
  }
  func.func @transform_3(%arg0: i32, %arg1: i32) -> (i32, i32) {
    %c1_i32 = arith.constant 1 : i32
    %0 = arith.muli %arg0, %c1_i32 : i32
    %1 = arith.addi %0, %arg1 : i32
    %c0_i32 = arith.constant 0 : i32
    %c0_i32_0 = arith.constant 0 : i32
    return %c0_i32, %1 : i32, i32
  }
  func.func @transform_4(%arg0: i32, %arg1: i32) -> (i32, i32) {
    %c1_i32 = arith.constant 1 : i32
    %0 = arith.muli %arg0, %c1_i32 : i32
    %1 = arith.addi %0, %arg1 : i32
    %c0_i32 = arith.constant 0 : i32
    %c0_i32_0 = arith.constant 0 : i32
    return %c0_i32, %1 : i32, i32
  }
  func.func @transform_5(%arg0: i32, %arg1: i32) -> (i32, i32) {
    %c0_i32 = arith.constant 0 : i32
    %c0_i32_0 = arith.constant 0 : i32
    return %arg0, %c0_i32 : i32, i32
  }
}

</mosaic_0001>

<llo_original>
// kernel: tpu_custom_call.1
$region0: #{tpu_custom_call.1}
  #allocation0 [shape = 'u32[]', space=smem, size = 0x4, offset = 0x4, fixed_abs, tag = 'smem constant byte address 0x4 - core index']
  #allocation1 [shape = 'u32[72,128]{1,0:T(1,128)}', space=vmem, size = 0x9000, scoped, tag = 'internal scratch']
  #allocation2 [shape = 'f32[1,128]{1,0:T(1,128)}', space=vmem, size = 0x200, scoped, tag = 'scratch operand']
  #allocation3 [shape = 'f32[1,128]{1,0:T(1,128)}', space=vmem, size = 0x200, scoped, tag = 'scratch operand']
  #allocation4 [shape = 'f32[1,128]{1,0:T(1,128)}', space=vmem, size = 0x200, scoped, tag = 'scratch operand']
  %s0 = inlined_call_operand.hbm [shape: f32[11,256], index: 0, kind: input, shape index: {}]
  %s1 = inlined_call_operand.hbm [shape: f32[11,256], index: 1, kind: input, shape index: {}]
  %s2 = inlined_call_operand.hbm [shape: f32[11,256], index: 2, kind: input, shape index: {}]
  %s3 = inlined_call_operand.hbm [shape: f32[2,256], index: 3, kind: input, shape index: {}]
  %s4 = inlined_call_operand.hbm [shape: f32[2,256], index: 4, kind: input, shape index: {}]
  %s5 = inlined_call_operand.hbm [shape: f32[16,128], index: 5, kind: output, shape index: {}]
  %s6 = sld [smem:[#allocation0]]
  $region81: #{tpu_custom_call.1} parent=0
    _
  %s8 = ssub.s32 1, %s6
  %s9 = scalar_select 0, %s8, %s6
  $region1: #{tpu_custom_call.1} parent=0
    #allocation5 [shape = 'u8[16384]{0}', space=vmem, size = 0x4000, scoped, tag = 'input window, operand 0']
    #allocation6 [shape = 's32[2]{0}', space=sflag, size = 0x8, scoped, tag = 'scoped memory for tpu_custom_call.1']
    #allocation7 [shape = 's32[2]{0}', space=sflag, size = 0x8, scoped, tag = 'scoped memory for tpu_custom_call.1']
    #allocation8 [shape = 'u8[16384]{0}', space=vmem, size = 0x4000, scoped, tag = 'input window, operand 1']
    #allocation9 [shape = 's32[2]{0}', space=sflag, size = 0x8, scoped, tag = 'scoped memory for tpu_custom_call.1']
    #allocation10 [shape = 'u8[16384]{0}', space=vmem, size = 0x4000, scoped, tag = 'input window, operand 2']
    #allocation11 [shape = 'u8[2048]{0}', space=vmem, size = 0x800, scoped, tag = 'input window, operand 3']
    #allocation12 [shape = 's32[2]{0}', space=sflag, size = 0x8, scoped, tag = 'scoped memory for tpu_custom_call.1']
    #allocation13 [shape = 'u8[2048]{0}', space=vmem, size = 0x800, scoped, tag = 'input window, operand 4']
    #allocation14 [shape = 'u8[8192]{0}', space=vmem, size = 0x2000, scoped, tag = 'output window, operand 0']
    %10 = vsyncpa [#allocation6], 0
    %s11 = scalar_lea.sflag [#allocation6], 1
    %12 = vsyncpa %s11, 0
    %13 = vsyncpa [#allocation9], 0
    %s14 = scalar_lea.sflag [#allocation9], 1
    %15 = vsyncpa %s14, 0
    %16 = vsyncpa [#allocation12], 0
    %s17 = scalar_lea.sflag [#allocation12], 1
    %18 = vsyncpa %s17, 0
    %19 = vsyncpa [#allocation7], 0
    %s20 = scalar_lea.sflag [#allocation7], 1
    %21 = vsyncpa %s20, 0
    loop: start=0, step=1, limit=4
    $region2: #{tpu_custom_call.1} parent=1 // loop_pre_header
      _
    $region3: #{tpu_custom_call.1} parent=1 // loop_header
      %s23 = sphi 0, %s27
      %p24 = scmp.ge.s32.totalorder %s23, 4
      %s30 = sphi 0, %s42
      %s31 = sphi 0, %s38
      %s32 = sphi 0, %s30
      %s33 = sphi 0, %s31
      %s34 = sphi 0, %s32
      %s35 = sphi 0, %s33
      %s47 = sphi 0, %s49
      %s50 = sphi 0, %s47
      %s51 = sphi 0, %s50
      %s67 = sphi 0, %s51
      %s75 = sphi 0, %s77
      %s78 = sphi 0, %s75
      %s79 = sphi 0, %s78
      %s95 = sphi 0, %s79
      %s103 = sphi 0, %s105
      %s106 = sphi 0, %s103
      %s107 = sphi 0, %s106
      %s123 = sphi 0, %s107
      %s131 = sphi 0, %s133
      %s134 = sphi 0, %s131
      %s135 = sphi 0, %s134
      %s151 = sphi 0, %s135
      %s159 = sphi 0, %s161
      %s162 = sphi 0, %s159
      %s163 = sphi 0, %s162
      %s179 = sphi 0, %s163
      %s185 = sphi 0, %s187
      %s188 = sphi 0, %s185
      %s189 = sphi 0, %s188
      %s205 = sphi 0, %s189
    $region4: #{tpu_custom_call.1} parent=1 // loop_header_branch
      %26 = sbr.rel (%p24) target = $region8
    $region5: #{tpu_custom_call.1} parent=1 // loop_body
      %s28 = ssub.s32 %s23, 1
      %s29 = ssub.s32 %s23, 2
      %s36 = sadd.s32 1, %s31
      %p37 = scmp.ge.s32.totalorder %s36, 1
      %s38 = scalar_select %p37, 0, %s36
      %s39 = sadd.s32 1, %s30
      %s40 = scalar_select %p37, %s39, %s30
      %p41 = scmp.ge.s32.totalorder %s40, 2
      %s42 = scalar_select %p41, 0, %s40
      %s43 = sadd.s32 %s30, %s31
      %s44 = sadd.s32 %s42, %s38
      %s45 = ssub.s32 %s43, %s44
      %p46 = scmp.eq.s32.totalorder %s45, 0
      %s48 = sadd.s32 %s47, 1
      %s49 = scalar_select %p46, %s47, %s48
      %p52 = pneg %p46
      %p53 = scmp.eq.s32.totalorder %s23, 1
      %p54 = por %p52, %p53
      %p55 = scmp.ne.s32.totalorder %s47, %s50
      %p56 = scmp.eq.s32.totalorder %s23, 0
      %p57 = por %p55, %p56
      %p58 = scmp.ne.s32.totalorder %s47, %s50
      %p59 = scmp.eq.s32.totalorder %s28, 1
      %p60 = por %p58, %p59
      %p61 = scmp.ne.s32.totalorder %s50, %s51
      %p62 = scmp.eq.s32.totalorder %s28, 0
      %p63 = por %p61, %p62
      %p64 = scmp.ne.s32.totalorder %s50, %s51
      %p65 = scmp.eq.s32.totalorder %s29, 1
      %p66 = por %p64, %p65
      %p68 = scmp.ne.s32.totalorder %s51, %s67
      %p69 = scmp.eq.s32.totalorder %s29, 0
      %p70 = por %p68, %p69
      %s71 = sadd.s32 %s30, %s31
      %s72 = sadd.s32 %s42, %s38
      %s73 = ssub.s32 %s71, %s72
      %p74 = scmp.eq.s32.totalorder %s73, 0
      %s76 = sadd.s32 %s75, 1
      %s77 = scalar_select %p74, %s75, %s76
      %p80 = pneg %p74
      %p81 = scmp.eq.s32.totalorder %s23, 1
      %p82 = por %p80, %p81
      %p83 = scmp.ne.s32.totalorder %s75, %s78
      %p84 = scmp.eq.s32.totalorder %s23, 0
      %p85 = por %p83, %p84
      %p86 = scmp.ne.s32.totalorder %s75, %s78
      %p87 = scmp.eq.s32.totalorder %s28, 1
      %p88 = por %p86, %p87
      %p89 = scmp.ne.s32.totalorder %s78, %s79
      %p90 = scmp.eq.s32.totalorder %s28, 0
      %p91 = por %p89, %p90
      %p92 = scmp.ne.s32.totalorder %s78, %s79
      %p93 = scmp.eq.s32.totalorder %s29, 1
      %p94 = por %p92, %p93
      %p96 = scmp.ne.s32.totalorder %s79, %s95
      %p97 = scmp.eq.s32.totalorder %s29, 0
      %p98 = por %p96, %p97
      %s99 = sadd.s32 %s30, %s31
      %s100 = sadd.s32 %s42, %s38
      %s101 = ssub.s32 %s99, %s100
      %p102 = scmp.eq.s32.totalorder %s101, 0
      %s104 = sadd.s32 %s103, 1
      %s105 = scalar_select %p102, %s103, %s104
      %p108 = pneg %p102
      %p109 = scmp.eq.s32.totalorder %s23, 1
      %p110 = por %p108, %p109
      %p111 = scmp.ne.s32.totalorder %s103, %s106
      %p112 = scmp.eq.s32.totalorder %s23, 0
      %p113 = por %p111, %p112
      %p114 = scmp.ne.s32.totalorder %s103, %s106
      %p115 = scmp.eq.s32.totalorder %s28, 1
      %p116 = por %p114, %p115
      %p117 = scmp.ne.s32.totalorder %s106, %s107
      %p118 = scmp.eq.s32.totalorder %s28, 0
      %p119 = por %p117, %p118
      %p120 = scmp.ne.s32.totalorder %s106, %s107
      %p121 = scmp.eq.s32.totalorder %s29, 1
      %p122 = por %p120, %p121
      %p124 = scmp.ne.s32.totalorder %s107, %s123
      %p125 = scmp.eq.s32.totalorder %s29, 0
      %p126 = por %p124, %p125
      %s127 = sadd.s32 %s30, %s31
      %s128 = sadd.s32 %s42, %s38
      %s129 = ssub.s32 %s127, %s128
      %p130 = scmp.eq.s32.totalorder %s129, 0
      %s132 = sadd.s32 %s131, 1
      %s133 = scalar_select %p130, %s131, %s132
      %p136 = pneg %p130
      %p137 = scmp.eq.s32.totalorder %s23, 1
      %p138 = por %p136, %p137
      %p139 = scmp.ne.s32.totalorder %s131, %s134
      %p140 = scmp.eq.s32.totalorder %s23, 0
      %p141 = por %p139, %p140
      %p142 = scmp.ne.s32.totalorder %s131, %s134
      %p143 = scmp.eq.s32.totalorder %s28, 1
      %p144 = por %p142, %p143
      %p145 = scmp.ne.s32.totalorder %s134, %s135
      %p146 = scmp.eq.s32.totalorder %s28, 0
      %p147 = por %p145, %p146
      %p148 = scmp.ne.s32.totalorder %s134, %s135
      %p149 = scmp.eq.s32.totalorder %s29, 1
      %p150 = por %p148, %p149
      %p152 = scmp.ne.s32.totalorder %s135, %s151
      %p153 = scmp.eq.s32.totalorder %s29, 0
      %p154 = por %p152, %p153
      %s155 = sadd.s32 %s30, %s31
      %s156 = sadd.s32 %s42, %s38
      %s157 = ssub.s32 %s155, %s156
      %p158 = scmp.eq.s32.totalorder %s157, 0
      %s160 = sadd.s32 %s159, 1
      %s161 = scalar_select %p158, %s159, %s160
      %p164 = pneg %p158
      %p165 = scmp.eq.s32.totalorder %s23, 1
      %p166 = por %p164, %p165
      %p167 = scmp.ne.s32.totalorder %s159, %s162
      %p168 = scmp.eq.s32.totalorder %s23, 0
      %p169 = por %p167, %p168
      %p170 = scmp.ne.s32.totalorder %s159, %s162
      %p171 = scmp.eq.s32.totalorder %s28, 1
      %p172 = por %p170, %p171
      %p173 = scmp.ne.s32.totalorder %s162, %s163
      %p174 = scmp.eq.s32.totalorder %s28, 0
      %p175 = por %p173, %p174
      %p176 = scmp.ne.s32.totalorder %s162, %s163
      %p177 = scmp.eq.s32.totalorder %s29, 1
      %p178 = por %p176, %p177
      %p180 = scmp.ne.s32.totalorder %s163, %s179
      %p181 = scmp.eq.s32.totalorder %s29, 0
      %p182 = por %p180, %p181
      %s183 = ssub.s32 %s30, %s42
      %p184 = scmp.eq.s32.totalorder %s183, 0
      %s186 = sadd.s32 %s185, 1
      %s187 = scalar_select %p184, %s185, %s186
      %p190 = pneg %p184
      %p191 = scmp.eq.s32.totalorder %s23, 1
      %p192 = por %p190, %p191
      %p193 = scmp.ne.s32.totalorder %s185, %s188
      %p194 = scmp.eq.s32.totalorder %s23, 0
      %p195 = por %p193, %p194
      %p196 = scmp.ne.s32.totalorder %s185, %s188
      %p197 = scmp.eq.s32.totalorder %s28, 1
      %p198 = por %p196, %p197
      %p199 = scmp.ne.s32.totalorder %s188, %s189
      %p200 = scmp.eq.s32.totalorder %s28, 0
      %p201 = por %p199, %p200
      %p202 = scmp.ne.s32.totalorder %s188, %s189
      %p203 = scmp.eq.s32.totalorder %s29, 1
      %p204 = por %p202, %p203
      %p206 = scmp.ne.s32.totalorder %s189, %s205
      %p207 = scmp.eq.s32.totalorder %s29, 0
      %p208 = por %p206, %p207
      %p209 = scmp.le.s32.totalorder 1, %s23
      %p210 = scmp.lt.s32.totalorder %s23, 3
      %p211 = pnand %p209, %p210
      %p212 = pneg %p211
      // Predicated region
      $region9: #{tpu_custom_call.1} parent=5 // pred_check
        _
      $region10: #{tpu_custom_call.1} parent=5 // pred_check_branch
        %214 = sbr.rel (%p211) target = $region12
      $region11: #{tpu_custom_call.1} parent=5 // pred_region
        %s215 = ssub.s32 %s23, 1
      $region12: #{tpu_custom_call.1} parent=5 // pred_fallthru
        _
      %p216 = scmp.lt.s32.totalorder %s23, 2
      // Predicated region
      $region13: #{tpu_custom_call.1} parent=5 // pred_check
        %p217 = pneg %p216
      $region14: #{tpu_custom_call.1} parent=5 // pred_check_branch
        %219 = sbr.rel (%p217) target = $region16
      $region15: #{tpu_custom_call.1} parent=5 // pred_region
        // Predicated region
        $region17: #{tpu_custom_call.1} parent=15 // pred_check
          %p220 = pneg %p57
        $region18: #{tpu_custom_call.1} parent=15 // pred_check_branch
          %222 = sbr.rel (%p220) target = $region20
        $region19: #{tpu_custom_call.1} parent=15 // pred_region
          %s223 = sand.u32 %s47, 1
          %s224 = scalar_lea.sflag [#allocation6], %s223
          %s225 = sand.u32 %s47, 1
          %s226 = smul.addr %s225, 16
          %s227 = scalar_lea.vmem [#allocation5], %s226
          %s228 = sadd.s32 %s30, %s31
          %230 = vsyncadd %s224, 0
          %s231 = smul.addr %s228, 8
          %s232 = scalar_lea.hbm %s0, %s231
          %s233 = sshll.u32 %s232, 4
          %s234 = int_to_ptr.hbm [resolvable:$true] %s233
          %s235 = sshll.u32 %s227, 4
          %s236 = int_to_ptr.vmem [resolvable:$true] %s235
          %241 = dma.hbm_to_vmem [thread:$0]  %s234, 256, %s236, %s224, 256, 128, 8
        $region20: #{tpu_custom_call.1} parent=15 // pred_fallthru
          _
        // Predicated region
        $region21: #{tpu_custom_call.1} parent=15 // pred_check
          %p242 = pneg %p85
        $region22: #{tpu_custom_call.1} parent=15 // pred_check_branch
          %244 = sbr.rel (%p242) target = $region24
        $region23: #{tpu_custom_call.1} parent=15 // pred_region
          %s245 = sand.u32 %s23, 1
          %s246 = scalar_lea.sflag [#allocation9], %s245
          %s247 = sand.u32 %s75, 1
          %s248 = smul.addr %s247, 16
          %s249 = scalar_lea.vmem [#allocation8], %s248
          %s250 = sadd.s32 %s30, %s31
          %252 = vsyncadd %s246, 0
          %s253 = smul.addr %s250, 8
          %s254 = scalar_lea.hbm %s1, %s253
          %s255 = sshll.u32 %s254, 4
          %s256 = int_to_ptr.hbm [resolvable:$true] %s255
          %s257 = sshll.u32 %s249, 4
          %s258 = int_to_ptr.vmem [resolvable:$true] %s257
          %263 = dma.hbm_to_vmem [thread:$0]  %s256, 256, %s258, %s246, 256, 128, 8
        $region24: #{tpu_custom_call.1} parent=15 // pred_fallthru
          _
        // Predicated region
        $region25: #{tpu_custom_call.1} parent=15 // pred_check
          %p264 = pneg %p113
        $region26: #{tpu_custom_call.1} parent=15 // pred_check_branch
          %266 = sbr.rel (%p264) target = $region28
        $region27: #{tpu_custom_call.1} parent=15 // pred_region
          %s267 = sand.u32 %s23, 1
          %s268 = scalar_lea.sflag [#allocation9], %s267
          %s269 = sand.u32 %s103, 1
          %s270 = smul.addr %s269, 16
          %s271 = scalar_lea.vmem [#allocation10], %s270
          %s272 = sadd.s32 %s30, %s31
          %274 = vsyncadd %s268, 0
          %s275 = smul.addr %s272, 8
          %s276 = scalar_lea.hbm %s2, %s275
          %s277 = sshll.u32 %s276, 4
          %s278 = int_to_ptr.hbm [resolvable:$true] %s277
          %s279 = sshll.u32 %s271, 4
          %s280 = int_to_ptr.vmem [resolvable:$true] %s279
          %285 = dma.hbm_to_vmem [thread:$0]  %s278, 256, %s280, %s268, 256, 128, 8
        $region28: #{tpu_custom_call.1} parent=15 // pred_fallthru
          _
        // Predicated region
        $region29: #{tpu_custom_call.1} parent=15 // pred_check
          %p286 = pneg %p141
        $region30: #{tpu_custom_call.1} parent=15 // pred_check_branch
          %288 = sbr.rel (%p286) target = $region32
        $region31: #{tpu_custom_call.1} parent=15 // pred_region
          %s289 = sand.u32 %s23, 1
          %s290 = scalar_lea.sflag [#allocation12], %s289
          %s291 = sand.u32 %s131, 1
          %s292 = smul.addr %s291, 2
          %s293 = scalar_lea.vmem [#allocation11], %s292
          %s294 = sadd.s32 %s30, %s31
          %296 = vsyncadd %s290, 0
          %s297 = smul.addr %s294, 2
          %s298 = scalar_lea.hbm %s3, %s297
          %s300 = sshll.u32 %s298, 4
          %s301 = int_to_ptr.hbm [resolvable:$true] %s300
          %s302 = sshll.u32 %s293, 4
          %s303 = int_to_ptr.vmem [resolvable:$true] %s302
          %305 = dma.hbm_to_vmem [thread:$0]  %s301, 32, %s303, %s290
        $region32: #{tpu_custom_call.1} parent=15 // pred_fallthru
          _
        // Predicated region
        $region33: #{tpu_custom_call.1} parent=15 // pred_check
          %p306 = pneg %p169
        $region34: #{tpu_custom_call.1} parent=15 // pred_check_branch
          %308 = sbr.rel (%p306) target = $region36
        $region35: #{tpu_custom_call.1} parent=15 // pred_region
          %s309 = sand.u32 %s23, 1
          %s310 = scalar_lea.sflag [#allocation12], %s309
          %s311 = sand.u32 %s159, 1
          %s312 = smul.addr %s311, 2
          %s313 = scalar_lea.vmem [#allocation13], %s312
          %s314 = sadd.s32 %s30, %s31
          %316 = vsyncadd %s310, 0
          %s317 = smul.addr %s314, 2
          %s318 = scalar_lea.hbm %s4, %s317
          %s320 = sshll.u32 %s318, 4
          %s321 = int_to_ptr.hbm [resolvable:$true] %s320
          %s322 = sshll.u32 %s313, 4
          %s323 = int_to_ptr.vmem [resolvable:$true] %s322
          %325 = dma.hbm_to_vmem [thread:$0]  %s321, 32, %s323, %s310
        $region36: #{tpu_custom_call.1} parent=15 // pred_fallthru
          _
      $region16: #{tpu_custom_call.1} parent=5 // pred_fallthru
        _
      %p326 = scmp.le.s32.totalorder 1, %s23
      %p327 = scmp.lt.s32.totalorder %s23, 3
      %p328 = pnand %p326, %p327
      %p329 = pneg %p328
      // Predicated region
      $region37: #{tpu_custom_call.1} parent=5 // pred_check
        _
      $region38: #{tpu_custom_call.1} parent=5 // pred_check_branch
        %331 = sbr.rel (%p328) target = $region40
      $region39: #{tpu_custom_call.1} parent=5 // pred_region
        %s332 = ssub.s32 %s23, 1
        %s333 = sand.u32 %s50, 1
        %s334 = scalar_lea.sflag [#allocation6], %s333
        %s335 = sand.u32 %s50, 1
        %s336 = smul.addr %s335, 16
        %s337 = scalar_lea.vmem [#allocation5], %s336
        // Predicated region
        $region41: #{tpu_custom_call.1} parent=39 // pred_check
          %p338 = pneg %p63
        $region42: #{tpu_custom_call.1} parent=39 // pred_check_branch
          %340 = sbr.rel (%p338) target = $region44
        $region43: #{tpu_custom_call.1} parent=39 // pred_region
          %342 = dma.done %s334, 256
        $region44: #{tpu_custom_call.1} parent=39 // pred_fallthru
          _
        %s343 = sand.u32 %s28, 1
        %s344 = scalar_lea.sflag [#allocation9], %s343
        %s345 = sand.u32 %s78, 1
        %s346 = smul.addr %s345, 16
        %s347 = scalar_lea.vmem [#allocation8], %s346
        // Predicated region
        $region45: #{tpu_custom_call.1} parent=39 // pred_check
          %p348 = pneg %p91
        $region46: #{tpu_custom_call.1} parent=39 // pred_check_branch
          %350 = sbr.rel (%p348) target = $region48
        $region47: #{tpu_custom_call.1} parent=39 // pred_region
          %352 = dma.done %s344, 256
        $region48: #{tpu_custom_call.1} parent=39 // pred_fallthru
          _
        %s353 = sand.u32 %s28, 1
        %s354 = scalar_lea.sflag [#allocation9], %s353
        %s355 = sand.u32 %s106, 1
        %s356 = smul.addr %s355, 16
        %s357 = scalar_lea.vmem [#allocation10], %s356
        // Predicated region
        $region49: #{tpu_custom_call.1} parent=39 // pred_check
          %p358 = pneg %p119
        $region50: #{tpu_custom_call.1} parent=39 // pred_check_branch
          %360 = sbr.rel (%p358) target = $region52
        $region51: #{tpu_custom_call.1} parent=39 // pred_region
          %362 = dma.done %s354, 256
        $region52: #{tpu_custom_call.1} parent=39 // pred_fallthru
          _
        %s363 = sand.u32 %s28, 1
        %s364 = scalar_lea.sflag [#allocation12], %s363
        %s365 = sand.u32 %s134, 1
        %s366 = smul.addr %s365, 2
        %s367 = scalar_lea.vmem [#allocation11], %s366
        // Predicated region
        $region53: #{tpu_custom_call.1} parent=39 // pred_check
          %p368 = pneg %p147
        $region54: #{tpu_custom_call.1} parent=39 // pred_check_branch
          %370 = sbr.rel (%p368) target = $region56
        $region55: #{tpu_custom_call.1} parent=39 // pred_region
          %372 = dma.done %s364, 32
        $region56: #{tpu_custom_call.1} parent=39 // pred_fallthru
          _
        %s373 = sand.u32 %s28, 1
        %s374 = scalar_lea.sflag [#allocation12], %s373
        %s375 = sand.u32 %s162, 1
        %s376 = smul.addr %s375, 2
        %s377 = scalar_lea.vmem [#allocation13], %s376
        // Predicated region
        $region57: #{tpu_custom_call.1} parent=39 // pred_check
          %p378 = pneg %p175
        $region58: #{tpu_custom_call.1} parent=39 // pred_check_branch
          %380 = sbr.rel (%p378) target = $region60
        $region59: #{tpu_custom_call.1} parent=39 // pred_region
          %382 = dma.done %s374, 32
        $region60: #{tpu_custom_call.1} parent=39 // pred_fallthru
          _
        %s383 = sand.u32 %s50, 1
        %s384 = scalar_lea.sflag [#allocation6], %s383
        %s385 = sand.u32 %s50, 1
        %s386 = smul.addr %s385, 16
        %s387 = scalar_lea.vmem [#allocation5], %s386
        %p388 = pneg %p63
        %p389 = pneg %p60
        %s390 = sand.u32 %s28, 1
        %s391 = scalar_lea.sflag [#allocation9], %s390
        %s392 = sand.u32 %s78, 1
        %s393 = smul.addr %s392, 16
        %s394 = scalar_lea.vmem [#allocation8], %s393
        %p395 = pneg %p91
        %p396 = pneg %p88
        %s397 = sand.u32 %s28, 1
        %s398 = scalar_lea.sflag [#allocation9], %s397
        %s399 = sand.u32 %s106, 1
        %s400 = smul.addr %s399, 16
        %s401 = scalar_lea.vmem [#allocation10], %s400
        %p402 = pneg %p119
        %p403 = pneg %p116
        %s404 = sand.u32 %s28, 1
        %s405 = scalar_lea.sflag [#allocation12], %s404
        %s406 = sand.u32 %s134, 1
        %s407 = smul.addr %s406, 2
        %s408 = scalar_lea.vmem [#allocation11], %s407
        %p409 = pneg %p147
        %p410 = pneg %p144
        %s411 = sand.u32 %s28, 1
        %s412 = scalar_lea.sflag [#allocation12], %s411
        %s413 = sand.u32 %s162, 1
        %s414 = smul.addr %s413, 2
        %s415 = scalar_lea.vmem [#allocation13], %s414
        %p416 = pneg %p175
        %p417 = pneg %p172
        %p418 = pneg %p201
        %p419 = pneg %p198
        %s420 = sand.u32 %s188, 1
        %s421 = scalar_lea.sflag [#allocation7], %s420
        %s422 = sand.u32 %s188, 1
        %s423 = smul.addr %s422, 8
        %s424 = scalar_lea.vmem [#allocation14], %s423
        %s425 = sadd.s32 %s32, %s33
        %s426 = sadd.s32 %s32, %s33
        %s427 = sadd.s32 %s32, %s33
        %s428 = sadd.s32 %s32, %s33
        %s429 = sadd.s32 %s32, %s33
        %p430 = scmp.eq.s32.totalorder %s33, 0
        // Predicated region
        $region61: #{tpu_custom_call.1} parent=39 // pred_check
          %p431 = pneg %p430
        $region62: #{tpu_custom_call.1} parent=39 // pred_check_branch
          %433 = sbr.rel (%p431) target = $region64
        $region63: #{tpu_custom_call.1} parent=39 // pred_region
          %434 = vst [vmem:[#allocation2] sm:$0x1] 0.0
          %435 = vst [vmem:[#allocation3] sm:$0x1] 0.0
          %436 = vst [vmem:[#allocation4] sm:$0x1] 0.0
        $region64: #{tpu_custom_call.1} parent=39 // pred_fallthru
          _
        %v437 = vld [vmem:[%s337] sm:$0xff]
        %v438 = vld [vmem:[%s337 + $0x8] sm:$0x7]
        %v439 = vld [vmem:[%s347] sm:$0xff]
        %v440 = vld [vmem:[%s347 + $0x8] sm:$0x7]
        %v441 = vld [vmem:[%s357] sm:$0xff]
        %v442 = vld [vmem:[%s357 + $0x8] sm:$0x7]
        %v443 = vld [vmem:[%s367] sm:$0x3]
        %v444 = vld [vmem:[%s377] sm:$0x3]
        %v445 = vmul.f32 %v439, %v437
        %v447 = vrot.slane %v445, 1
        %v449 = vadd.f32 %v445, %v447
        %v450 = vmul.f32 %v437, %v437
        %v452 = vrot.slane %v450, 1
        %v454 = vadd.f32 %v450, %v452
        %v455 = vrsqrt.pop %v454
        %v456 = vmul.f32 %v455, %v454
        %v457 = vmul.f32 %v456, %v455
        %v458 = vmul.f32 0.5, %v457
        %v459 = vsub.f32 1.5, %v458
        %v460 = vmul.f32 %v455, %v459
        %v461 = vmul.f32 %v454, %v460
        %vm462 = vcmp.eq.f32.partialorder %v454, inf
        %v463 = vsel %vm462, %v454, %v461
        %vm464 = vcmp.eq.f32.partialorder %v454, 0.0
        %v465 = vand.u32 %v454, 2147483648
        %v466 = vsel %vm464, %v465, %v463
        %v467 = vmax.f32 %v466, 1e-08
        %v468 = vmul.f32 %v439, %v439
        %v470 = vrot.slane %v468, 1
        %v472 = vadd.f32 %v468, %v470
        %v473 = vrsqrt.pop %v472
        %v474 = vmul.f32 %v473, %v472
        %v475 = vmul.f32 %v474, %v473
        %v476 = vmul.f32 0.5, %v475
        %v477 = vsub.f32 1.5, %v476
        %v478 = vmul.f32 %v473, %v477
        %v479 = vmul.f32 %v472, %v478
        %vm480 = vcmp.eq.f32.partialorder %v472, inf
        %v481 = vsel %vm480, %v472, %v479
        %vm482 = vcmp.eq.f32.partialorder %v472, 0.0
        %v483 = vand.u32 %v472, 2147483648
        %v484 = vsel %vm482, %v483, %v481
        %v485 = vmax.f32 %v484, 1e-08
        %v486 = vmul.f32 %v467, %v485
        %v487 = vrcp.pop %v486
        %v488 = vmul.f32 %v449, %v487
        %vm489 = vcmp.lt.f32.partialorder %v488, 0.0
        %vm490 = vcmp.gt.f32.partialorder %v444, 0.5
        %v491 = vsel %vm490, 1, 0
        %v492 = vrot.slane %v491, 2
        %vm493 = vcmp.ne.s32.totalorder %v492, 0
        %vm494 = vmand %vm489, %vm493
        %v495 = vsel %vm494, -1.0, 1.0
        %v496 = vsub.f32 %v437, %v439
        %v497 = vsub.f32 %v438, %v440
        %v498 = vand.u32 2147483647, %v496
        %v499 = vand.u32 2147483647, %v497
        %v500 = vmul.f32 %v498, %v441
        %v501 = vmul.f32 %v499, %v442
        %v502 = vmul.f32 %v439, %v495
        %v503 = vsub.f32 %v437, %v502
        %v504 = vand.u32 2147483647, %v503
        %v505 = vmul.f32 %v504, %v441
        %v507 = vrot.slane %v495, 7
        %v509 = vmul.f32 %v439, %v507
        %v510 = vsub.f32 %v437, %v509
        %v511 = vand.u32 2147483647, %v510
        %v512 = vmul.f32 %v511, %v441
        %v514 = vrot.slane %v512, 1
        %v516 = vadd.f32 %v505, %v514
        %vm517 = vcmask 1042432
        %v518 = vsel %vm517, %v501, 0.0
        %v519 = vadd.f32 %v500, %v518
        %v520 = vrot.slane %v519, 4
        %v521 = vadd.f32 %v519, %v520
        %v522 = vrot.slane %v521, 2
        %v523 = vadd.f32 %v521, %v522
        %v524 = vrot.slane %v523, 1
        %v525 = vadd.f32 %v523, %v524
        %v526 = vsub.f32 %v525, %v500
        %v528 = vrot.slane %v500, 1
        %v530 = vsub.f32 %v526, %v528
        %v531 = vld [vmem:[#allocation2] sm:$0x1]
        %v532 = vadd.f32 %v530, %v516
        %534 = vst [vmem:[#allocation1] sm:$0xff] %v532
        %s535 = scalar_lea.vmem [#allocation1], 6
        %v536 = vld [vmem:[%s535] ss:$9 sm:$0xff]
        %v538 = vadd.f32 %v531, %v536
        %539 = vst [vmem:[#allocation2] sm:$0x1] %v538
        %v540 = vsub.f32 %v439, %v437
        %v541 = vmul.f32 %v540, %v540
        %v543 = vrot.slane %v541, 1
        %v545 = vadd.f32 %v541, %v543
        %v546 = vrot.slane %v541, 2
        %v548 = vadd.f32 %v545, %v546
        %v549 = vrsqrt.pop %v548
        %v550 = vmul.f32 %v549, %v548
        %v551 = vmul.f32 %v550, %v549
        %v552 = vmul.f32 0.5, %v551
        %v553 = vsub.f32 1.5, %v552
        %v554 = vmul.f32 %v549, %v553
        %v555 = vmul.f32 %v548, %v554
        %vm556 = vcmp.eq.f32.partialorder %v548, inf
        %v557 = vsel %vm556, %v548, %v555
        %vm558 = vcmp.eq.f32.partialorder %v548, 0.0
        %v559 = vand.u32 %v548, 2147483648
        %v560 = vsel %vm558, %v559, %v557
        %v561 = vsub.f32 0.0, %v560
        %v562 = vmul.f32 %v561, 1.442695
        %v563 = vpow.pop %v562
        %v564 = vmax.f32 %v443, 0.0
        %v565 = vmul.f32 %v443, %v563
        %v566 = vsub.f32 %v564, %v565
        %v567 = vand.u32 2147483647, %v443
        %v568 = vsub.f32 0.0, %v567
        %v569 = vmul.f32 %v568, 1.442695
        %v570 = vpow.pop %v569
        %v571 = vadd.f32 %v570, 1.0
        %v572 = vlog2.pop %v571
        %v573 = vmul.f32 %v572, 0.6931472
        %v574 = vmul.f32 -0.5, %v570
        %v575 = vadd.f32 %v574, 1.0
        %v576 = vmul.f32 %v575, %v570
        %v577 = vand.u32 2147483647, %v570
        %vm578 = vcmp.lt.f32.partialorder %v577, 0.0004427343
        %v579 = vsel %vm578, %v576, %v573
        %v580 = vadd.f32 %v566, %v579
        %v581 = vld [vmem:[#allocation3] sm:$0x1]
        %v583 = vrot.slane %v444, 1
        %v585 = vmul.f32 %v580, %v583
        %v586 = vadd.f32 %v581, %v585
        %587 = vst [vmem:[#allocation3] sm:$0x1] %v586
        %v588 = vxor.u32 %v443, 2147483648
        %v589 = vmul.f32 %v588, 1.442695
        %v590 = vpow.pop %v589
        %v591 = vadd.f32 %v590, 1.0
        %v592 = vrcp.pop %v591
        %v593 = vmul.f32 %v591, %v592
        %v594 = vsub.f32 1.0, %v593
        %v595 = vmul.f32 %v592, %v594
        %v596 = vadd.f32 %v592, %v595
        %vm597 = vweird.f32 %v591
        %vm598 = vweird.f32 %v592
        %vm599 = vmor %vm597, %vm598
        %v600 = vsel %vm599, %v592, %v596
        %v601 = vand.u32 2147483647, %v591
        %vm602 = vcmp.eq.f32.partialorder %v601, 8.507059e+37
        %v603 = vand.u32 %v591, 2147483648
        %v604 = vor.u32 1.1754944e-38, %v603
        %v605 = vsel %vm602, %v604, %v600
        %v606 = vmul.f32 1.0, %v605
        %v607 = vmul.f32 %v488, %v495
        %vm608 = vcmp.gt.f32.partialorder %v607, 0.0
        %v609 = vsel %vm608, 1, 0
        %v610 = vcvt.s32.f32 %v609
        %v611 = vsub.f32 1.0, %v606
        %v612 = vsub.f32 1.0, %v610
        %v613 = vmul.f32 %v612, %v612
        %v614 = vmul.f32 %v613, %v613
        %v615 = vadd.f32 %v606, 1e-12
        %v616 = vlog2.pop %v615
        %v617 = vmul.f32 %v616, 0.6931472
        %v618 = vsub.f32 0.0, %v617
        %v619 = vmul.f32 %v618, %v611
        %v620 = vmul.f32 %v619, %v611
        %v622 = vrot.slane %v610, 5
        %v624 = vmul.f32 %v620, %v622
        %v625 = vadd.f32 %v611, 1e-12
        %v626 = vlog2.pop %v625
        %v627 = vmul.f32 %v626, 0.6931472
        %v628 = vmul.f32 %v627, %v606
        %v629 = vmul.f32 %v628, %v606
        %v631 = vrot.slane %v614, 5
        %v633 = vmul.f32 %v629, %v631
        %v634 = vsub.f32 %v624, %v633
        %v635 = vld [vmem:[#allocation4] sm:$0x1]
        %v636 = vmul.f32 %v634, %v444
        %638 = vst [vmem:[#allocation1] sm:$0xff] %v636
        %s639 = scalar_lea.vmem [#allocation1], 1
        %v640 = vld [vmem:[%s639] ss:$9 sm:$0xff]
        %v642 = vadd.f32 %v635, %v640
        %643 = vst [vmem:[#allocation4] sm:$0x1] %v642
        // Predicated region
        $region65: #{tpu_custom_call.1} parent=39 // pred_check
          %p644 = pneg %p430
        $region66: #{tpu_custom_call.1} parent=39 // pred_check_branch
          %646 = sbr.rel (%p644) target = $region68
        $region67: #{tpu_custom_call.1} parent=39 // pred_region
          %v647 = vld [vmem:[#allocation2] sm:$0x1]
          %vm648 = vcmask 1040384
          %v649 = vsel %vm648, %v647, 0.0
          %650 = vadd.xlane.f32.xlu0 %v649
          %v651 = vpop.xlane.xlu0 %650
          %v652 = vrot.slane %v651, 4
          %v653 = vadd.f32 %v651, %v652
          %v654 = vrot.slane %v653, 2
          %v655 = vadd.f32 %v653, %v654
          %v656 = vrot.slane %v655, 1
          %v657 = vadd.f32 %v655, %v656
          %s658 = vtos %v657
          %v659 = vld [vmem:[#allocation3] sm:$0x1]
          %v660 = vsel %vm648, %v659, 0.0
          %661 = vadd.xlane.f32.xlu0 %v660
          %v662 = vpop.xlane.xlu0 %661
          %v663 = vrot.slane %v662, 4
          %v664 = vadd.f32 %v662, %v663
          %v665 = vrot.slane %v664, 2
          %v666 = vadd.f32 %v664, %v665
          %v667 = vrot.slane %v666, 1
          %v668 = vadd.f32 %v666, %v667
          %s669 = vtos %v668
          %v670 = vld [vmem:[#allocation4] sm:$0x1]
          %v671 = vsel %vm648, %v670, 0.0
          %672 = vadd.xlane.f32.xlu0 %v671
          %v673 = vpop.xlane.xlu0 %672
          %v674 = vrot.slane %v673, 4
          %v675 = vadd.f32 %v673, %v674
          %v676 = vrot.slane %v675, 2
          %v677 = vadd.f32 %v675, %v676
          %v678 = vrot.slane %v677, 1
          %v679 = vadd.f32 %v677, %v678
          %s680 = vtos %v679
          %v681 = vlaneseq
          %v682 = vshrl.u32 %v681, 7
          %vm683 = vcmp.eq.s32.totalorder %v682, 0
          %v684 = vstv %s658
          %v685 = vsel %vm683, %v684, 0.0
          %vm686 = vcmp.eq.s32.totalorder %v682, 1
          %v687 = vstv %s669
          %v688 = vsel %vm686, %v687, %v685
          %vm689 = vcmp.eq.s32.totalorder %v682, 2
          %v690 = vstv %s680
          %v691 = vsel %vm689, %v690, %v688
          %692 = vst [vmem:[%s424] sm:$0xff] %v691
        $region68: #{tpu_custom_call.1} parent=39 // pred_fallthru
          _
        %s693 = sand.u32 %s188, 1
        %s694 = scalar_lea.sflag [#allocation7], %s693
        %s695 = sand.u32 %s188, 1
        %s696 = smul.addr %s695, 8
        %s697 = scalar_lea.vmem [#allocation14], %s696
        // Predicated region
        $region69: #{tpu_custom_call.1} parent=39 // pred_check
          %p698 = pneg %p198
        $region70: #{tpu_custom_call.1} parent=39 // pred_check_branch
          %700 = sbr.rel (%p698) target = $region72
        $region71: #{tpu_custom_call.1} parent=39 // pred_region
          %702 = vsyncadd %s694, 0
          %s703 = smul.addr %s32, 8
          %s704 = scalar_lea.hbm %s5, %s703
          %s706 = sshll.u32 %s697, 4
          %s707 = int_to_ptr.vmem [resolvable:$true] %s706
          %s708 = sshll.u32 %s704, 4
          %s709 = int_to_ptr.hbm [resolvable:$true] %s708
          %711 = dma.vmem_to_hbm [thread:$0]  %s707, 128, %s709, %s694
        $region72: #{tpu_custom_call.1} parent=39 // pred_fallthru
          _
      $region40: #{tpu_custom_call.1} parent=5 // pred_fallthru
        _
      %p712 = scmp.le.s32.totalorder 2, %s23
      // Predicated region
      $region73: #{tpu_custom_call.1} parent=5 // pred_check
        %p713 = pneg %p712
      $region74: #{tpu_custom_call.1} parent=5 // pred_check_branch
        %715 = sbr.rel (%p713) target = $region76
      $region75: #{tpu_custom_call.1} parent=5 // pred_region
        %s716 = ssub.s32 %s23, 2
        // Predicated region
        $region77: #{tpu_custom_call.1} parent=75 // pred_check
          %p717 = pneg %p204
        $region78: #{tpu_custom_call.1} parent=75 // pred_check_branch
          %719 = sbr.rel (%p717) target = $region80
        $region79: #{tpu_custom_call.1} parent=75 // pred_region
          %s720 = sand.u32 %s189, 1
          %s721 = scalar_lea.sflag [#allocation7], %s720
          %s722 = sand.u32 %s189, 1
          %s723 = smul.addr %s722, 8
          %s724 = scalar_lea.vmem [#allocation14], %s723
          %726 = dma.done %s721, 128
        $region80: #{tpu_custom_call.1} parent=75 // pred_fallthru
          _
      $region76: #{tpu_custom_call.1} parent=5 // pred_fallthru
        _
    $region6: #{tpu_custom_call.1} parent=1 // loop_footer
      %s27 = sadd.s32 1, %s23
    $region7: #{tpu_custom_call.1} parent=1 // loop_footer_branch
      %22 = sbr.rel target = $region3
    $region8: #{tpu_custom_call.1} parent=1 // loop_exit
      _
    %727 = vsyncpa [#allocation6], 1
    %s728 = scalar_lea.sflag [#allocation6], 1
    %729 = vsyncpa %s728, 1
    %730 = vsyncpa [#allocation9], 1
    %s731 = scalar_lea.sflag [#allocation9], 1
    %732 = vsyncpa %s731, 1
    %733 = vsyncpa [#allocation12], 1
    %s734 = scalar_lea.sflag [#allocation12], 1
    %735 = vsyncpa %s734, 1
    %736 = vsyncpa [#allocation7], 1
    %s737 = scalar_lea.sflag [#allocation7], 1
    %738 = vsyncpa %s737, 1

</llo_original>
